<compile_context>
chip_gen: v5e
topology: v5e:2x2
jax: 0.10.0
libtpu: 0.0.40
codegen_flags: <defaults>
</compile_context>

<pallas_src>
import functools

import jax
import jax.numpy as jnp
from jax import lax
from jax.experimental import pallas as pl
from jax.experimental.pallas import tpu as pltpu


def _round_up(x, m):
    return ((x + m - 1) // m) * m


def _ce_kernel(pred_ref, label_ref, loss_ref):
    """Per-row softmax cross-entropy: loss_i = logsumexp(pred_i) - pred_i[label_i]."""
    pred = pred_ref[...].astype(jnp.float32)        # (TN, C)  -- C on lane axis
    lab = label_ref[...]                            # (TN, 1)  int32
    tn, c = pred.shape

    # numerically stable logsumexp over the class (lane) axis
    m = jnp.max(pred, axis=-1, keepdims=True)                               # (TN, 1)
    lse = m + jnp.log(jnp.sum(jnp.exp(pred - m), axis=-1, keepdims=True))   # (TN, 1)

    # gather pred[i, label[i]] via a one-hot compare (no dynamic gather on TPU)
    cls_id = lax.broadcasted_iota(jnp.int32, (tn, c), 1)
    picked = jnp.sum(jnp.where(cls_id == lab, pred, 0.0), axis=-1, keepdims=True)

    loss_ref[...] = (lse - picked).astype(loss_ref.dtype)                   # (TN, 1)


def cross_entropy_loss(cls_score, label, weight=None, avg_factor=None,
                       reduction='mean', loss_weight=1.0, block_rows=512):
    """Forward of CrossEntropyLoss (softmax path).

    cls_score: (N, C) float logits.  label: (N,) int class indices.
    Returns loss_weight * weight_reduce_loss(per_sample_ce, weight, reduction, avg_factor).
    """
    # TODO(synk): use_sigmoid (BCE-with-logits) / use_soft (soft labels) and
    # class_weight / pos_weight branches are not implemented (defaults are off/None).
    n, c = cls_score.shape

    # Fuse up to `block_rows` rows per grid step; sublane dim must be a multiple of 8.
    tn = min(_round_up(block_rows, 8), _round_up(n, 8))
    n_pad = _round_up(n, tn)

    pred = cls_score
    lab = label.astype(jnp.int32).reshape(n, 1)
    if n_pad != n:
        pred = jnp.pad(pred, ((0, n_pad - n), (0, 0)))
        lab = jnp.pad(lab, ((0, n_pad - n), (0, 0)))

    dt_size = jnp.dtype(cls_score.dtype).itemsize
    cost = pl.CostEstimate(
        flops=6 * n * c,                 # max/sub/exp-sum/compare/select/sum
        transcendentals=n * c + n,       # exp per element + log per row
        bytes_accessed=n * c * dt_size + n * 4 + n * 4,
    )

    per_sample = pl.pallas_call(
        _ce_kernel,
        out_shape=jax.ShapeDtypeStruct((n_pad, 1), jnp.float32),
        grid=(n_pad // tn,),
        in_specs=[
            pl.BlockSpec((tn, c), lambda i: (i, 0)),   # full class dim per block
            pl.BlockSpec((tn, 1), lambda i: (i, 0)),   # labels
        ],
        out_specs=pl.BlockSpec((tn, 1), lambda i: (i, 0)),
        compiler_params=pltpu.CompilerParams(dimension_semantics=("parallel",)),
        cost_estimate=cost,
    )(pred, lab)

    loss = per_sample[:n, 0]                           # drop padded rows

    # weight_reduce_loss semantics (tiny scalar/elementwise ops, done outside the kernel)
    if weight is not None:
        loss = loss * weight.astype(jnp.float32)
    if avg_factor is None:
        if reduction == 'mean':
            loss = jnp.mean(loss)
        elif reduction == 'sum':
            loss = jnp.sum(loss)
        elif reduction != 'none':
            raise ValueError(f'invalid reduction: {reduction}')
    else:
        if reduction == 'mean':
            loss = jnp.sum(loss) / avg_factor
        elif reduction != 'none':
            raise ValueError('avg_factor can not be used with reduction="sum"')

    return loss_weight * loss


def _reference_per_sample(cls_score, label):
    logp = jax.nn.log_softmax(cls_score.astype(jnp.float32), axis=-1)
    return -jnp.take_along_axis(logp, label[:, None].astype(jnp.int32), axis=-1)[:, 0]


if __name__ == "__main__":
    key = jax.random.PRNGKey(0)
    k1, k2 = jax.random.split(key)

    N, C = 8, 32
    cls_score = jax.random.normal(k1, (N, C), dtype=jnp.float32)
    label = jax.random.randint(k2, (N,), 0, C, dtype=jnp.int32)

    # default forward: reduction='mean', loss_weight=1.0
    loss = cross_entropy_loss(cls_score, label)
    loss = jax.block_until_ready(loss)

    ref_per_sample = _reference_per_sample(cls_score, label)
    ref_mean = jnp.mean(ref_per_sample)
    assert loss.shape == (), "mean reduction must be a scalar"
    assert jnp.allclose(loss, ref_mean, atol=1e-5, rtol=1e-5), "mean loss mismatch"

    # also check the elementwise path
    loss_none = jax.block_until_ready(cross_entropy_loss(cls_score, label, reduction='none'))
    assert jnp.allclose(loss_none, ref_per_sample, atol=1e-5, rtol=1e-5), "per-sample mismatch"

    print("KERNEL_OK")
</pallas_src>

<mosaic_0001>
module attributes {stable_mosaic.version = 11 : i64} {
  func.func @_ce_kernel(%arg0: i32, %arg1: memref<8x32xf32, #tpu.memory_space<vmem>>, %arg2: memref<8x1xi32, #tpu.memory_space<vmem>>, %arg3: memref<8x1xf32, #tpu.memory_space<vmem>>) attributes {dimension_semantics = [#tpu.dimension_semantics<parallel>], iteration_bounds = array<i64: 1>, scalar_prefetch = 0 : i64, scratch_operands = 0 : i64, tpu.core_type = #tpu.core_type<tc>, window_params = [{transform_indices = @transform_0, window_bounds = array<i64: 8, 32>}, {transform_indices = @transform_1, window_bounds = array<i64: 8, 1>}, {transform_indices = @transform_2, window_bounds = array<i64: 8, 1>}]} {
    %c0 = arith.constant 0 : index
    %c0_0 = arith.constant 0 : index
    %0 = vector.load %arg1[%c0, %c0_0] : memref<8x32xf32, #tpu.memory_space<vmem>>, vector<8x32xf32>
    %c0_1 = arith.constant 0 : index
    %c0_2 = arith.constant 0 : index
    %1 = vector.load %arg2[%c0_1, %c0_2] : memref<8x1xi32, #tpu.memory_space<vmem>>, vector<8x1xi32>
    %cst = arith.constant dense<0xFF800000> : vector<8xf32>
    %2 = vector.multi_reduction <maximumf>, %0, %cst [1] : vector<8x32xf32> to vector<8xf32>
    %3 = vector.shape_cast %2 : vector<8xf32> to vector<8x1xf32>
    %4 = vector.broadcast %3 : vector<8x1xf32> to vector<8x32xf32>
    %5 = arith.subf %0, %4 : vector<8x32xf32>
    %6 = math.exp %5 : vector<8x32xf32>
    %cst_3 = arith.constant dense<0.000000e+00> : vector<8xf32>
    %7 = vector.multi_reduction <add>, %6, %cst_3 [1] : vector<8x32xf32> to vector<8xf32>
    %8 = vector.shape_cast %7 : vector<8xf32> to vector<8x1xf32>
    %9 = math.log %8 : vector<8x1xf32>
    %10 = arith.addf %3, %9 : vector<8x1xf32>
    %11 = tpu.iota {dimensions = array<i32: 1>} : vector<8x32xi32>
    %12 = vector.broadcast %1 : vector<8x1xi32> to vector<8x32xi32>
    %13 = arith.cmpi eq, %11, %12 : vector<8x32xi32>
    %cst_4 = arith.constant 0.000000e+00 : f32
    %14 = vector.broadcast %cst_4 : f32 to vector<8x32xf32>
    %15 = arith.select %13, %0, %14 : vector<8x32xi1>, vector<8x32xf32>
    %cst_5 = arith.constant dense<0.000000e+00> : vector<8xf32>
    %16 = vector.multi_reduction <add>, %15, %cst_5 [1] : vector<8x32xf32> to vector<8xf32>
    %17 = vector.shape_cast %16 : vector<8xf32> to vector<8x1xf32>
    %18 = arith.subf %10, %17 : vector<8x1xf32>
    %c0_6 = arith.constant 0 : index
    %c0_7 = arith.constant 0 : index
    %19 = vector.load %arg3[%c0_6, %c0_7] : memref<8x1xf32, #tpu.memory_space<vmem>>, vector<8x1xf32>
    tpu.vector_store %arg3[%c0_6, %c0_7], %18 {strides = array<i32>} : memref<8x1xf32, #tpu.memory_space<vmem>>, vector<8x1xf32>,
    return
  }
  func.func @transform_0(%arg0: i32) -> (i32, i32) {
    %c0_i32 = arith.constant 0 : i32
    %c0_i32_0 = arith.constant 0 : i32
    return %arg0, %c0_i32 : i32, i32
  }
  func.func @transform_1(%arg0: i32) -> (i32, i32) {
    %c0_i32 = arith.constant 0 : i32
    %c0_i32_0 = arith.constant 0 : i32
    return %arg0, %c0_i32 : i32, i32
  }
  func.func @transform_2(%arg0: i32) -> (i32, i32) {
    %c0_i32 = arith.constant 0 : i32
    %c0_i32_0 = arith.constant 0 : i32
    return %arg0, %c0_i32 : i32, i32
  }
}

</mosaic_0001>

<llo_original>
// kernel: tpu_custom_call.1
$region0: #{tpu_custom_call.1}
  #allocation0 [shape = 'u32[]', space=smem, size = 0x4, offset = 0x4, fixed_abs, tag = 'smem constant byte address 0x4 - core index']
  #allocation1 [shape = 'u32[72,128]{1,0:T(1,128)}', space=vmem, size = 0x9000, scoped, tag = 'internal scratch']
  %s0 = inlined_call_operand.vmem [shape: f32[8,32], index: 0, kind: input, shape index: {}]
  %s1 = inlined_call_operand.vmem [shape: s32[8,1], index: 1, kind: input, shape index: {}]
  %s2 = inlined_call_operand.vmem [shape: f32[8,1], index: 2, kind: output, shape index: {}]
  %s3 = sld [smem:[#allocation0]]
  $region18: #{tpu_custom_call.1} parent=0
    _
  %s5 = ssub.s32 1, %s3
  %s6 = scalar_select 0, %s5, %s3
  // Predicated region
  $region2: #{tpu_custom_call.1} parent=0 // pred_check
    _
  $region3: #{tpu_custom_call.1} parent=0 // pred_check_branch
    %8 = sbr.rel (0) target = $region5
  $region4: #{tpu_custom_call.1} parent=0 // pred_region
    _
  $region5: #{tpu_custom_call.1} parent=0 // pred_fallthru
    _
  // Predicated region
  $region6: #{tpu_custom_call.1} parent=0 // pred_check
    _
  $region7: #{tpu_custom_call.1} parent=0 // pred_check_branch
    %10 = sbr.rel (0) target = $region9
  $region8: #{tpu_custom_call.1} parent=0 // pred_region
    _
  $region9: #{tpu_custom_call.1} parent=0 // pred_fallthru
    _
  %v11 = vld [vmem:[%s0] sm:$0xff]
  %v12 = vld [vmem:[%s1] sm:$0xff]
  %vm13 = vcmask 261120
  %v14 = vsel %vm13, %v11, -inf
  %15 = vmax.xlane.f32.xlu0 %v14
  %v16 = vpop.xlane.xlu0 %15
  %v17 = vsub.f32 %v11, %v16
  %v18 = vmul.f32 %v17, 1.442695
  %v19 = vpow.pop %v18
  %v20 = vsel %vm13, %v19, 0.0
  %21 = vadd.xlane.f32.xlu0 %v20
  %v22 = vpop.xlane.xlu0 %21
  %v23 = vlog2.pop %v22
  %v24 = vmul.f32 %v23, 0.6931472
  %v25 = vadd.f32 %v16, %v24
  %v26 = vlaneseq
  %v27 = vand.u32 %v26, 127
  %28 = vset.pattern.permute.xlu0 0
  %29 = vperm.xlu0 %28, %v12
  %v30 = vpop.permute.xlu0 %29
  %vm31 = vcmp.eq.s32.totalorder %v27, %v30
  %v32 = vsel %vm31, %v11, 0.0
  %v33 = vsel %vm13, %v32, 0.0
  %34 = vadd.xlane.f32.xlu0 %v33
  %v35 = vpop.xlane.xlu0 %34
  %v36 = vsub.f32 %v25, %v35
  %vm37 = vcmask 7168
  %38 = vst.msk [vmem:[%s2] sm:$0xff] %vm37, %v36
  // Predicated region
  $region10: #{tpu_custom_call.1} parent=0 // pred_check
    _
  $region11: #{tpu_custom_call.1} parent=0 // pred_check_branch
    %40 = sbr.rel (0) target = $region13
  $region12: #{tpu_custom_call.1} parent=0 // pred_region
    _
  $region13: #{tpu_custom_call.1} parent=0 // pred_fallthru
    _
  // Predicated region
  $region14: #{tpu_custom_call.1} parent=0 // pred_check
    _
  $region15: #{tpu_custom_call.1} parent=0 // pred_check_branch
    %42 = sbr.rel (0) target = $region17
  $region16: #{tpu_custom_call.1} parent=0 // pred_region
    _
  $region17: #{tpu_custom_call.1} parent=0 // pred_fallthru
    _

</llo_original>
